<compile_context>
chip_gen: v5e
topology: v5e:2x2
jax: 0.10.0
libtpu: 0.0.40
codegen_flags: <defaults>
</compile_context>

<pallas_src>
import jax
import jax.numpy as jnp
from jax import lax
from jax.experimental import pallas as pl
from jax.experimental.pallas import tpu as pltpu

ZERO = 1e-05
LEAKY_SLOPE = 0.01  # torch.nn.LeakyReLU default negative_slope
LANE = 128


def _leaky_relu(x):
    return jnp.where(x > 0, x, LEAKY_SLOPE * x)


def _round_up(x, m):
    return (x + m - 1) // m * m


def actor_kernel(x_ref, w1_ref, b1_ref, w2_ref, b2_ref, w3t_ref, b3_ref,
                 out_ref):
    # x_ref: [TM, D] streamed row tile; weights resident across grid steps.
    x = x_ref[...]

    h1 = jnp.dot(x, w1_ref[...], preferred_element_type=jnp.float32) + b1_ref[...]
    h1 = _leaky_relu(h1)

    h2 = jnp.dot(h1, w2_ref[...], preferred_element_type=jnp.float32) + b2_ref[...]
    h2 = _leaky_relu(h2)

    # Head emitted transposed: w3t [2, H] contracted with h2 [TM, H] on H
    # -> [2, TM], so the output's last (lane) dim is the row tile (lane-dense
    # unmasked stores).  Bias is a [2, 1] column broadcast.
    head = lax.dot_general(w3t_ref[...], h2, (((1,), (1,)), ((), ())),
                           preferred_element_type=jnp.float32) + b3_ref[...]

    # Row 0 = mu, row 1 = exp(log_sigma) + 1e-5.  exp rides the EUP slot
    # (~free), so compute it full-lane on the whole [2, TM] tile and select
    # the sigma row — single full-width store, no concat / partial stores.
    is_sigma_row = lax.broadcasted_iota(jnp.int32, head.shape, 0) == 1
    out_ref[...] = jnp.where(is_sigma_row, jnp.exp(head) + ZERO, head)


def prepare_params(params):
    """One-time param prep (hoist out of the per-step path).

    Slices the 2*num_actions head down to the two columns actually used by
    forward() (mu, log-sigma) and pre-transposes them for the lane-dense
    kernel output.
    """
    w1, b1, w2, b2, w3, b3 = params
    w3t = jnp.transpose(w3[:, :2])   # [2, H]
    b3t = jnp.transpose(b3[:, :2])   # [2, 1]
    return (w1, b1, w2, b2, w3t, b3t)


def actor_forward(state, prepared_params, tile_m=16384):
    """state: [B, S, num_inputs] float32 -> (mu [B, S], sigma [B, S])."""
    w1, b1, w2, b2, w3t, b3t = prepared_params
    B, S, D = state.shape
    H = w1.shape[1]
    M = B * S

    # Equal-sized, lane-aligned (128) row tiles.  Waste is bounded by < 128
    # padded rows per tile; grid >= 2 when possible so v7x megacore can split.
    grid = max(1, pl.cdiv(M, tile_m))
    if M >= 2 * LANE:
        grid = max(grid, 2)
    tm = _round_up(pl.cdiv(M, grid), LANE)
    grid = pl.cdiv(M, tm)
    M_pad = grid * tm

    x2d = state.reshape(M, D)
    if M_pad != M:
        x2d = jnp.pad(x2d, ((0, M_pad - M), (0, 0)))

    const_map = lambda i: (0, 0)  # weights / biases stay resident

    out = pl.pallas_call(
        actor_kernel,
        out_shape=jax.ShapeDtypeStruct((2, M_pad), jnp.float32),
        grid=(grid,),
        in_specs=[
            pl.BlockSpec((tm, D), lambda i: (i, 0)),   # x: streamed row tiles
            pl.BlockSpec((D, H), const_map),           # w1
            pl.BlockSpec((1, H), const_map),           # b1
            pl.BlockSpec((H, H), const_map),           # w2
            pl.BlockSpec((1, H), const_map),           # b2
            pl.BlockSpec((2, H), const_map),           # w3 (sliced + transposed)
            pl.BlockSpec((2, 1), const_map),           # b3 (sliced + transposed)
        ],
        out_specs=pl.BlockSpec((2, tm), lambda i: (0, i)),  # lane-dense
        compiler_params=pltpu.CompilerParams(
            dimension_semantics=("parallel",),  # megacore-shard row tiles on v7x
        ),
    )(x2d, w1, b1, w2, b2, w3t, b3t)

    mu = out[0, :M].reshape(B, S)
    sigma = out[1, :M].reshape(B, S)
    return mu, sigma


def init_params(key, num_inputs, num_actions, hidden_size=64):
    """Deterministic synthetic init (PyTorch-Linear-style uniform fan-in)."""
    ks = jax.random.split(key, 6)

    def lin(kw, kb, fan_in, fan_out):
        bound = 1.0 / jnp.sqrt(fan_in)
        w = jax.random.uniform(kw, (fan_in, fan_out), jnp.float32, -bound, bound)
        b = jax.random.uniform(kb, (1, fan_out), jnp.float32, -bound, bound)
        return w, b

    w1, b1 = lin(ks[0], ks[1], num_inputs, hidden_size)
    w2, b2 = lin(ks[2], ks[3], hidden_size, hidden_size)
    w3, b3 = lin(ks[4], ks[5], hidden_size, num_actions * 2)
    return (w1, b1, w2, b2, w3, b3)


def actor_reference(state, params):
    """Pure-JAX reference of the PyTorch forward."""
    w1, b1, w2, b2, w3, b3 = params
    h1 = _leaky_relu(state @ w1 + b1[0])
    h2 = _leaky_relu(h1 @ w2 + b2[0])
    out = h2 @ w3 + b3[0]
    mu = out[:, :, 0]
    sigma = jnp.exp(out[:, :, 1]) + ZERO
    return mu, sigma


def _check(B, S, num_inputs, num_actions, hidden_size, seed):
    key = jax.random.PRNGKey(seed)
    k_state, k_params = jax.random.split(key)
    state = jax.random.normal(k_state, (B, S, num_inputs), dtype=jnp.float32)
    params = init_params(k_params, num_inputs, num_actions, hidden_size)
    prepared = prepare_params(params)   # hoisted one-time prep

    mu, sigma = actor_forward(state, prepared)
    mu = jax.block_until_ready(mu)
    sigma = jax.block_until_ready(sigma)

    mu_ref, sigma_ref = actor_reference(state, params)
    assert mu.shape == (B, S) and sigma.shape == (B, S)
    assert jnp.allclose(mu, mu_ref, atol=1e-5, rtol=1e-5)
    assert jnp.allclose(sigma, sigma_ref, atol=1e-5, rtol=1e-5)


if __name__ == "__main__":
    # Small, even shape (M = 16 rows -> single 128-row tile after padding).
    _check(B=2, S=8, num_inputs=16, num_actions=2, hidden_size=32, seed=0)
    # Ragged M (= 15) exercises the pad-and-slice remainder path, default H=64.
    _check(B=3, S=5, num_inputs=16, num_actions=2, hidden_size=64, seed=0)
    print("KERNEL_OK")
</pallas_src>

<mosaic_0001>
module attributes {stable_mosaic.version = 11 : i64} {
  func.func @actor_kernel(%arg0: i32, %arg1: memref<128x16xf32, #tpu.memory_space<vmem>>, %arg2: memref<16x32xf32, #tpu.memory_space<vmem>>, %arg3: memref<1x32xf32, #tpu.memory_space<vmem>>, %arg4: memref<32x32xf32, #tpu.memory_space<vmem>>, %arg5: memref<1x32xf32, #tpu.memory_space<vmem>>, %arg6: memref<2x32xf32, #tpu.memory_space<vmem>>, %arg7: memref<2x1xf32, #tpu.memory_space<vmem>>, %arg8: memref<2x128xf32, #tpu.memory_space<vmem>>) attributes {dimension_semantics = [#tpu.dimension_semantics<parallel>], iteration_bounds = array<i64: 1>, scalar_prefetch = 0 : i64, scratch_operands = 0 : i64, tpu.core_type = #tpu.core_type<tc>, window_params = [{transform_indices = @transform_0, window_bounds = array<i64: 128, 16>}, {pipeline_mode = #tpu.pipeline_mode<synchronous>, transform_indices = @transform_1, window_bounds = array<i64: 16, 32>}, {pipeline_mode = #tpu.pipeline_mode<synchronous>, transform_indices = @transform_2, window_bounds = array<i64: 1, 32>}, {pipeline_mode = #tpu.pipeline_mode<synchronous>, transform_indices = @transform_3, window_bounds = array<i64: 32, 32>}, {pipeline_mode = #tpu.pipeline_mode<synchronous>, transform_indices = @transform_4, window_bounds = array<i64: 1, 32>}, {pipeline_mode = #tpu.pipeline_mode<synchronous>, transform_indices = @transform_5, window_bounds = array<i64: 2, 32>}, {pipeline_mode = #tpu.pipeline_mode<synchronous>, transform_indices = @transform_6, window_bounds = array<i64: 2, 1>}, {transform_indices = @transform_7, window_bounds = array<i64: 2, 128>}]} {
    %c0 = arith.constant 0 : index
    %c0_0 = arith.constant 0 : index
    %0 = vector.load %arg1[%c0, %c0_0] : memref<128x16xf32, #tpu.memory_space<vmem>>, vector<128x16xf32>
    %c0_1 = arith.constant 0 : index
    %c0_2 = arith.constant 0 : index
    %1 = vector.load %arg2[%c0_1, %c0_2] : memref<16x32xf32, #tpu.memory_space<vmem>>, vector<16x32xf32>
    %cst = arith.constant dense<0.000000e+00> : vector<128x32xf32>
    %2 = tpu.matmul %0, %1, %cst {dimension_numbers = #tpu.dot_dimension_numbers<[1], [0], [0], [1], [0, 0, 1, 1], [], []>} : vector<128x16xf32>, vector<16x32xf32>, vector<128x32xf32> -> vector<128x32xf32>
    %c0_3 = arith.constant 0 : index
    %c0_4 = arith.constant 0 : index
    %3 = vector.load %arg3[%c0_3, %c0_4] : memref<1x32xf32, #tpu.memory_space<vmem>>, vector<1x32xf32>
    %4 = vector.broadcast %3 : vector<1x32xf32> to vector<128x32xf32>
    %5 = arith.addf %2, %4 : vector<128x32xf32>
    %cst_5 = arith.constant 0.000000e+00 : f32
    %6 = vector.broadcast %cst_5 : f32 to vector<128x32xf32>
    %7 = arith.cmpf ogt, %5, %6 : vector<128x32xf32>
    %cst_6 = arith.constant 0.00999999977 : f32
    %8 = vector.broadcast %cst_6 : f32 to vector<128x32xf32>
    %9 = arith.mulf %8, %5 : vector<128x32xf32>
    %10 = arith.select %7, %5, %9 : vector<128x32xi1>, vector<128x32xf32>
    %c0_7 = arith.constant 0 : index
    %c0_8 = arith.constant 0 : index
    %11 = vector.load %arg4[%c0_7, %c0_8] : memref<32x32xf32, #tpu.memory_space<vmem>>, vector<32x32xf32>
    %cst_9 = arith.constant dense<0.000000e+00> : vector<128x32xf32>
    %12 = tpu.matmul %10, %11, %cst_9 {dimension_numbers = #tpu.dot_dimension_numbers<[1], [0], [0], [1], [0, 0, 1, 1], [], []>} : vector<128x32xf32>, vector<32x32xf32>, vector<128x32xf32> -> vector<128x32xf32>
    %c0_10 = arith.constant 0 : index
    %c0_11 = arith.constant 0 : index
    %13 = vector.load %arg5[%c0_10, %c0_11] : memref<1x32xf32, #tpu.memory_space<vmem>>, vector<1x32xf32>
    %14 = vector.broadcast %13 : vector<1x32xf32> to vector<128x32xf32>
    %15 = arith.addf %12, %14 : vector<128x32xf32>
    %cst_12 = arith.constant 0.000000e+00 : f32
    %16 = vector.broadcast %cst_12 : f32 to vector<128x32xf32>
    %17 = arith.cmpf ogt, %15, %16 : vector<128x32xf32>
    %cst_13 = arith.constant 0.00999999977 : f32
    %18 = vector.broadcast %cst_13 : f32 to vector<128x32xf32>
    %19 = arith.mulf %18, %15 : vector<128x32xf32>
    %20 = arith.select %17, %15, %19 : vector<128x32xi1>, vector<128x32xf32>
    %c0_14 = arith.constant 0 : index
    %c0_15 = arith.constant 0 : index
    %21 = vector.load %arg6[%c0_14, %c0_15] : memref<2x32xf32, #tpu.memory_space<vmem>>, vector<2x32xf32>
    %cst_16 = arith.constant dense<0.000000e+00> : vector<2x128xf32>
    %22 = tpu.matmul %21, %20, %cst_16 {dimension_numbers = #tpu.dot_dimension_numbers<[1], [1], [0], [0], [0, 0, 1, 0], [], []>} : vector<2x32xf32>, vector<128x32xf32>, vector<2x128xf32> -> vector<2x128xf32>
    %c0_17 = arith.constant 0 : index
    %c0_18 = arith.constant 0 : index
    %23 = vector.load %arg7[%c0_17, %c0_18] : memref<2x1xf32, #tpu.memory_space<vmem>>, vector<2x1xf32>
    %24 = vector.broadcast %23 : vector<2x1xf32> to vector<2x128xf32>
    %25 = arith.addf %22, %24 : vector<2x128xf32>
    %26 = tpu.iota {dimensions = array<i32: 0>} : vector<2x128xi32>
    %c1_i32 = arith.constant 1 : i32
    %27 = vector.broadcast %c1_i32 : i32 to vector<2x128xi32>
    %28 = arith.cmpi eq, %26, %27 : vector<2x128xi32>
    %29 = math.exp %25 : vector<2x128xf32>
    %cst_19 = arith.constant 9.99999974E-6 : f32
    %30 = vector.broadcast %cst_19 : f32 to vector<2x128xf32>
    %31 = arith.addf %29, %30 : vector<2x128xf32>
    %32 = arith.select %28, %31, %25 : vector<2x128xi1>, vector<2x128xf32>
    %c0_20 = arith.constant 0 : index
    %c0_21 = arith.constant 0 : index
    %33 = vector.load %arg8[%c0_20, %c0_21] : memref<2x128xf32, #tpu.memory_space<vmem>>, vector<2x128xf32>
    tpu.vector_store %arg8[%c0_20, %c0_21], %32 {strides = array<i32>} : memref<2x128xf32, #tpu.memory_space<vmem>>, vector<2x128xf32>,
    return
  }
  func.func @transform_0(%arg0: i32) -> (i32, i32) {
    %c0_i32 = arith.constant 0 : i32
    %c0_i32_0 = arith.constant 0 : i32
    return %arg0, %c0_i32 : i32, i32
  }
  func.func @transform_1(%arg0: i32) -> (i32, i32) {
    %c0_i32 = arith.constant 0 : i32
    %c0_i32_0 = arith.constant 0 : i32
    %c0_i32_1 = arith.constant 0 : i32
    return %c0_i32, %c0_i32_0 : i32, i32
  }
  func.func @transform_2(%arg0: i32) -> (i32, i32) {
    %c0_i32 = arith.constant 0 : i32
    %c0_i32_0 = arith.constant 0 : i32
    %c0_i32_1 = arith.constant 0 : i32
    return %c0_i32, %c0_i32_0 : i32, i32
  }
  func.func @transform_3(%arg0: i32) -> (i32, i32) {
    %c0_i32 = arith.constant 0 : i32
    %c0_i32_0 = arith.constant 0 : i32
    %c0_i32_1 = arith.constant 0 : i32
    return %c0_i32, %c0_i32_0 : i32, i32
  }
  func.func @transform_4(%arg0: i32) -> (i32, i32) {
    %c0_i32 = arith.constant 0 : i32
    %c0_i32_0 = arith.constant 0 : i32
    %c0_i32_1 = arith.constant 0 : i32
    return %c0_i32, %c0_i32_0 : i32, i32
  }
  func.func @transform_5(%arg0: i32) -> (i32, i32) {
    %c0_i32 = arith.constant 0 : i32
    %c0_i32_0 = arith.constant 0 : i32
    %c0_i32_1 = arith.constant 0 : i32
    return %c0_i32, %c0_i32_0 : i32, i32
  }
  func.func @transform_6(%arg0: i32) -> (i32, i32) {
    %c0_i32 = arith.constant 0 : i32
    %c0_i32_0 = arith.constant 0 : i32
    %c0_i32_1 = arith.constant 0 : i32
    return %c0_i32, %c0_i32_0 : i32, i32
  }
  func.func @transform_7(%arg0: i32) -> (i32, i32) {
    %c0_i32 = arith.constant 0 : i32
    %c0_i32_0 = arith.constant 0 : i32
    return %c0_i32, %arg0 : i32, i32
  }
}

</mosaic_0001>

<llo_original>
// kernel: tpu_custom_call.1
$region0: #{tpu_custom_call.1}
  #allocation0 [shape = 'u32[]', space=smem, size = 0x4, offset = 0x4, fixed_abs, tag = 'smem constant byte address 0x4 - core index']
  #allocation1 [shape = 'u32[72,128]{1,0:T(1,128)}', space=vmem, size = 0x9000, scoped, tag = 'internal scratch']
  %s0 = inlined_call_operand.vmem [shape: f32[128,16], index: 0, kind: input, shape index: {}]
  %s1 = inlined_call_operand.vmem [shape: f32[16,32], index: 1, kind: input, shape index: {}]
  %s2 = inlined_call_operand.vmem [shape: f32[1,32], index: 2, kind: input, shape index: {}]
  %s3 = inlined_call_operand.vmem [shape: f32[32,32], index: 3, kind: input, shape index: {}]
  %s4 = inlined_call_operand.vmem [shape: f32[1,32], index: 4, kind: input, shape index: {}]
  %s5 = inlined_call_operand.vmem [shape: f32[2,32], index: 5, kind: input, shape index: {}]
  %s6 = inlined_call_operand.vmem [shape: f32[2,1], index: 6, kind: input, shape index: {}]
  %s7 = inlined_call_operand.hbm [shape: f32[2,128], index: 7, kind: output, shape index: {}]
  %s8 = sld [smem:[#allocation0]]
  $region38: #{tpu_custom_call.1} parent=0
    _
  %s10 = ssub.s32 1, %s8
  %s11 = scalar_select 0, %s10, %s8
  $region1: #{tpu_custom_call.1} parent=0
    #allocation2 [shape = 'u8[1024]{0}', space=vmem, size = 0x400, scoped, tag = 'output window, operand 0, single buffered']
    #allocation3 [shape = 's32[1]{0}', space=sflag, size = 0x4, scoped, tag = 'scoped memory for tpu_custom_call.1']
    %12 = vsyncpa [#allocation3], 0
    // Predicated region
    $region2: #{tpu_custom_call.1} parent=1 // pred_check
      _
    $region3: #{tpu_custom_call.1} parent=1 // pred_check_branch
      %14 = sbr.rel (0) target = $region5
    $region4: #{tpu_custom_call.1} parent=1 // pred_region
      _
    $region5: #{tpu_custom_call.1} parent=1 // pred_fallthru
      _
    // Predicated region
    $region6: #{tpu_custom_call.1} parent=1 // pred_check
      _
    $region7: #{tpu_custom_call.1} parent=1 // pred_check_branch
      %16 = sbr.rel (0) target = $region9
    $region8: #{tpu_custom_call.1} parent=1 // pred_region
      _
    $region9: #{tpu_custom_call.1} parent=1 // pred_fallthru
      _
    // Predicated region
    $region10: #{tpu_custom_call.1} parent=1 // pred_check
      _
    $region11: #{tpu_custom_call.1} parent=1 // pred_check_branch
      %18 = sbr.rel (0) target = $region13
    $region12: #{tpu_custom_call.1} parent=1 // pred_region
      _
    $region13: #{tpu_custom_call.1} parent=1 // pred_fallthru
      _
    // Predicated region
    $region14: #{tpu_custom_call.1} parent=1 // pred_check
      _
    $region15: #{tpu_custom_call.1} parent=1 // pred_check_branch
      %20 = sbr.rel (0) target = $region17
    $region16: #{tpu_custom_call.1} parent=1 // pred_region
      _
    $region17: #{tpu_custom_call.1} parent=1 // pred_fallthru
      _
    // Predicated region
    $region18: #{tpu_custom_call.1} parent=1 // pred_check
      _
    $region19: #{tpu_custom_call.1} parent=1 // pred_check_branch
      %22 = sbr.rel (0) target = $region21
    $region20: #{tpu_custom_call.1} parent=1 // pred_region
      _
    $region21: #{tpu_custom_call.1} parent=1 // pred_fallthru
      _
    // Predicated region
    $region22: #{tpu_custom_call.1} parent=1 // pred_check
      _
    $region23: #{tpu_custom_call.1} parent=1 // pred_check_branch
      %24 = sbr.rel (0) target = $region25
    $region24: #{tpu_custom_call.1} parent=1 // pred_region
      _
    $region25: #{tpu_custom_call.1} parent=1 // pred_fallthru
      _
    // Predicated region
    $region26: #{tpu_custom_call.1} parent=1 // pred_check
      _
    $region27: #{tpu_custom_call.1} parent=1 // pred_check_branch
      %26 = sbr.rel (0) target = $region29
    $region28: #{tpu_custom_call.1} parent=1 // pred_region
      _
    $region29: #{tpu_custom_call.1} parent=1 // pred_fallthru
      _
    %v27 = vld [vmem:[%s0] sm:$0xff]
    %v28 = vld [vmem:[%s0 + $0x8] sm:$0xff]
    %v29 = vld [vmem:[%s0 + $0x10] sm:$0xff]
    %v30 = vld [vmem:[%s0 + $0x18] sm:$0xff]
    %v31 = vld [vmem:[%s0 + $0x20] sm:$0xff]
    %v32 = vld [vmem:[%s0 + $0x28] sm:$0xff]
    %v33 = vld [vmem:[%s0 + $0x30] sm:$0xff]
    %v34 = vld [vmem:[%s0 + $0x38] sm:$0xff]
    %v35 = vld [vmem:[%s0 + $0x40] sm:$0xff]
    %v36 = vld [vmem:[%s0 + $0x48] sm:$0xff]
    %v37 = vld [vmem:[%s0 + $0x50] sm:$0xff]
    %v38 = vld [vmem:[%s0 + $0x58] sm:$0xff]
    %v39 = vld [vmem:[%s0 + $0x60] sm:$0xff]
    %v40 = vld [vmem:[%s0 + $0x68] sm:$0xff]
    %v41 = vld [vmem:[%s0 + $0x70] sm:$0xff]
    %v42 = vld [vmem:[%s0 + $0x78] sm:$0xff]
    %v43 = vld [vmem:[%s1] sm:$0xff]
    %v44 = vld [vmem:[%s1 + $0x8] sm:$0xff]
    %v45 = vld [vmem:[%s2] sm:$0x1]
    %v47 = vperm.slane %v45, 0
    %vm49 = vcmask 130048
    %v51 = vsel %vm49, %v27, 0
    %v54 = vsel %vm49, %v28, 0
    %v57 = vsel %vm49, %v29, 0
    %v60 = vsel %vm49, %v30, 0
    %v63 = vsel %vm49, %v31, 0
    %v66 = vsel %vm49, %v32, 0
    %v69 = vsel %vm49, %v33, 0
    %v72 = vsel %vm49, %v34, 0
    %v75 = vsel %vm49, %v35, 0
    %v78 = vsel %vm49, %v36, 0
    %v81 = vsel %vm49, %v37, 0
    %v84 = vsel %vm49, %v38, 0
    %v87 = vsel %vm49, %v39, 0
    %v90 = vsel %vm49, %v40, 0
    %v93 = vsel %vm49, %v41, 0
    %v96 = vsel %vm49, %v42, 0
    %98 = vmatpush.msra.mxu0 0.0
    %99 = vmatpush.msra.mxu0 0.0
    %100 = vmatpush.msra.mxu0 0.0
    %101 = vmatpush.msra.mxu0 0.0
    %102 = vmatpush.msra.mxu0 0.0
    %103 = vmatpush.msra.mxu0 0.0
    %104 = vmatpush.msra.mxu0 0.0
    %105 = vmatpush.msra.mxu0 0.0
    %106 = vmatpush.msra.mxu0 0.0
    %107 = vmatpush.msra.mxu0 0.0
    %108 = vmatpush.msra.mxu0 0.0
    %109 = vmatpush.msra.mxu0 0.0
    %110 = vmatpush.msra.mxu0 0.0
    %111 = vmatpush.msra.mxu0 0.0
    %112 = vmatpush.msra.mxu0 %v44
    %113 = vmatpush.msra.mxu0 %v43
    %114 = vmatmul.f32.gmra.mxu0 %v51
    %v115 = vpop.f32.mrf.mxu0
    %v116 = vadd.f32 %v47, %v115
    %117 = vmatmul.f32.gmra.mxu0 %v54
    %v118 = vpop.f32.mrf.mxu0
    %v119 = vadd.f32 %v47, %v118
    %120 = vmatmul.f32.gmra.mxu0 %v57
    %v121 = vpop.f32.mrf.mxu0
    %v122 = vadd.f32 %v47, %v121
    %123 = vmatmul.f32.gmra.mxu0 %v60
    %v124 = vpop.f32.mrf.mxu0
    %v125 = vadd.f32 %v47, %v124
    %126 = vmatmul.f32.gmra.mxu0 %v63
    %v127 = vpop.f32.mrf.mxu0
    %v128 = vadd.f32 %v47, %v127
    %129 = vmatmul.f32.gmra.mxu0 %v66
    %v130 = vpop.f32.mrf.mxu0
    %v131 = vadd.f32 %v47, %v130
    %132 = vmatmul.f32.gmra.mxu0 %v69
    %v133 = vpop.f32.mrf.mxu0
    %v134 = vadd.f32 %v47, %v133
    %135 = vmatmul.f32.gmra.mxu0 %v72
    %v136 = vpop.f32.mrf.mxu0
    %v137 = vadd.f32 %v47, %v136
    %138 = vmatmul.f32.gmra.mxu0 %v75
    %v139 = vpop.f32.mrf.mxu0
    %v140 = vadd.f32 %v47, %v139
    %141 = vmatmul.f32.gmra.mxu0 %v78
    %v142 = vpop.f32.mrf.mxu0
    %v143 = vadd.f32 %v47, %v142
    %144 = vmatmul.f32.gmra.mxu0 %v81
    %v145 = vpop.f32.mrf.mxu0
    %v146 = vadd.f32 %v47, %v145
    %147 = vmatmul.f32.gmra.mxu0 %v84
    %v148 = vpop.f32.mrf.mxu0
    %v149 = vadd.f32 %v47, %v148
    %150 = vmatmul.f32.gmra.mxu0 %v87
    %v151 = vpop.f32.mrf.mxu0
    %v152 = vadd.f32 %v47, %v151
    %153 = vmatmul.f32.gmra.mxu0 %v90
    %v154 = vpop.f32.mrf.mxu0
    %v155 = vadd.f32 %v47, %v154
    %156 = vmatmul.f32.gmra.mxu0 %v93
    %v157 = vpop.f32.mrf.mxu0
    %v158 = vadd.f32 %v47, %v157
    %159 = vmatmul.f32.gmra.mxu0 %v96
    %v160 = vpop.f32.mrf.mxu0
    %v161 = vadd.f32 %v47, %v160
    %162 = vdwg.mxu0
    %vm163 = vcmp.gt.f32.partialorder %v116, 0.0
    %vm164 = vcmp.gt.f32.partialorder %v119, 0.0
    %vm165 = vcmp.gt.f32.partialorder %v122, 0.0
    %vm166 = vcmp.gt.f32.partialorder %v125, 0.0
    %vm167 = vcmp.gt.f32.partialorder %v128, 0.0
    %vm168 = vcmp.gt.f32.partialorder %v131, 0.0
    %vm169 = vcmp.gt.f32.partialorder %v134, 0.0
    %vm170 = vcmp.gt.f32.partialorder %v137, 0.0
    %vm171 = vcmp.gt.f32.partialorder %v140, 0.0
    %vm172 = vcmp.gt.f32.partialorder %v143, 0.0
    %vm173 = vcmp.gt.f32.partialorder %v146, 0.0
    %vm174 = vcmp.gt.f32.partialorder %v149, 0.0
    %vm175 = vcmp.gt.f32.partialorder %v152, 0.0
    %vm176 = vcmp.gt.f32.partialorder %v155, 0.0
    %vm177 = vcmp.gt.f32.partialorder %v158, 0.0
    %vm178 = vcmp.gt.f32.partialorder %v161, 0.0
    %v179 = vmul.f32 %v116, 0.01
    %v180 = vmul.f32 %v119, 0.01
    %v181 = vmul.f32 %v122, 0.01
    %v182 = vmul.f32 %v125, 0.01
    %v183 = vmul.f32 %v128, 0.01
    %v184 = vmul.f32 %v131, 0.01
    %v185 = vmul.f32 %v134, 0.01
    %v186 = vmul.f32 %v137, 0.01
    %v187 = vmul.f32 %v140, 0.01
    %v188 = vmul.f32 %v143, 0.01
    %v189 = vmul.f32 %v146, 0.01
    %v190 = vmul.f32 %v149, 0.01
    %v191 = vmul.f32 %v152, 0.01
    %v192 = vmul.f32 %v155, 0.01
    %v193 = vmul.f32 %v158, 0.01
    %v194 = vmul.f32 %v161, 0.01
    %v195 = vsel %vm163, %v116, %v179
    %v196 = vsel %vm164, %v119, %v180
    %v197 = vsel %vm165, %v122, %v181
    %v198 = vsel %vm166, %v125, %v182
    %v199 = vsel %vm167, %v128, %v183
    %v200 = vsel %vm168, %v131, %v184
    %v201 = vsel %vm169, %v134, %v185
    %v202 = vsel %vm170, %v137, %v186
    %v203 = vsel %vm171, %v140, %v187
    %v204 = vsel %vm172, %v143, %v188
    %v205 = vsel %vm173, %v146, %v189
    %v206 = vsel %vm174, %v149, %v190
    %v207 = vsel %vm175, %v152, %v191
    %v208 = vsel %vm176, %v155, %v192
    %v209 = vsel %vm177, %v158, %v193
    %v210 = vsel %vm178, %v161, %v194
    %v211 = vld [vmem:[%s3] sm:$0xff]
    %v212 = vld [vmem:[%s3 + $0x8] sm:$0xff]
    %v213 = vld [vmem:[%s3 + $0x10] sm:$0xff]
    %v214 = vld [vmem:[%s3 + $0x18] sm:$0xff]
    %v215 = vld [vmem:[%s4] sm:$0x1]
    %v217 = vperm.slane %v215, 0
    %vm219 = vcmask 261120
    %v221 = vsel %vm219, %v195, 0
    %v224 = vsel %vm219, %v196, 0
    %v227 = vsel %vm219, %v197, 0
    %v230 = vsel %vm219, %v198, 0
    %v233 = vsel %vm219, %v199, 0
    %v236 = vsel %vm219, %v200, 0
    %v239 = vsel %vm219, %v201, 0
    %v242 = vsel %vm219, %v202, 0
    %v245 = vsel %vm219, %v203, 0
    %v248 = vsel %vm219, %v204, 0
    %v251 = vsel %vm219, %v205, 0
    %v254 = vsel %vm219, %v206, 0
    %v257 = vsel %vm219, %v207, 0
    %v260 = vsel %vm219, %v208, 0
    %v263 = vsel %vm219, %v209, 0
    %v266 = vsel %vm219, %v210, 0
    %268 = vmatpush.msra.mxu0 0.0
    %269 = vmatpush.msra.mxu0 0.0
    %270 = vmatpush.msra.mxu0 0.0
    %271 = vmatpush.msra.mxu0 0.0
    %272 = vmatpush.msra.mxu0 0.0
    %273 = vmatpush.msra.mxu0 0.0
    %274 = vmatpush.msra.mxu0 0.0
    %275 = vmatpush.msra.mxu0 0.0
    %276 = vmatpush.msra.mxu0 0.0
    %277 = vmatpush.msra.mxu0 0.0
    %278 = vmatpush.msra.mxu0 0.0
    %279 = vmatpush.msra.mxu0 0.0
    %280 = vmatpush.msra.mxu0 %v214
    %281 = vmatpush.msra.mxu0 %v213
    %282 = vmatpush.msra.mxu0 %v212
    %283 = vmatpush.msra.mxu0 %v211
    %284 = vmatmul.f32.gmra.mxu0 %v221
    %v285 = vpop.f32.mrf.mxu0
    %v286 = vadd.f32 %v217, %v285
    %287 = vmatmul.f32.gmra.mxu0 %v224
    %v288 = vpop.f32.mrf.mxu0
    %v289 = vadd.f32 %v217, %v288
    %290 = vmatmul.f32.gmra.mxu0 %v227
    %v291 = vpop.f32.mrf.mxu0
    %v292 = vadd.f32 %v217, %v291
    %293 = vmatmul.f32.gmra.mxu0 %v230
    %v294 = vpop.f32.mrf.mxu0
    %v295 = vadd.f32 %v217, %v294
    %296 = vmatmul.f32.gmra.mxu0 %v233
    %v297 = vpop.f32.mrf.mxu0
    %v298 = vadd.f32 %v217, %v297
    %299 = vmatmul.f32.gmra.mxu0 %v236
    %v300 = vpop.f32.mrf.mxu0
    %v301 = vadd.f32 %v217, %v300
    %302 = vmatmul.f32.gmra.mxu0 %v239
    %v303 = vpop.f32.mrf.mxu0
    %v304 = vadd.f32 %v217, %v303
    %305 = vmatmul.f32.gmra.mxu0 %v242
    %v306 = vpop.f32.mrf.mxu0
    %v307 = vadd.f32 %v217, %v306
    %308 = vmatmul.f32.gmra.mxu0 %v245
    %v309 = vpop.f32.mrf.mxu0
    %v310 = vadd.f32 %v217, %v309
    %311 = vmatmul.f32.gmra.mxu0 %v248
    %v312 = vpop.f32.mrf.mxu0
    %v313 = vadd.f32 %v217, %v312
    %314 = vmatmul.f32.gmra.mxu0 %v251
    %v315 = vpop.f32.mrf.mxu0
    %v316 = vadd.f32 %v217, %v315
    %317 = vmatmul.f32.gmra.mxu0 %v254
    %v318 = vpop.f32.mrf.mxu0
    %v319 = vadd.f32 %v217, %v318
    %320 = vmatmul.f32.gmra.mxu0 %v257
    %v321 = vpop.f32.mrf.mxu0
    %v322 = vadd.f32 %v217, %v321
    %323 = vmatmul.f32.gmra.mxu0 %v260
    %v324 = vpop.f32.mrf.mxu0
    %v325 = vadd.f32 %v217, %v324
    %326 = vmatmul.f32.gmra.mxu0 %v263
    %v327 = vpop.f32.mrf.mxu0
    %v328 = vadd.f32 %v217, %v327
    %329 = vmatmul.f32.gmra.mxu0 %v266
    %v330 = vpop.f32.mrf.mxu0
    %v331 = vadd.f32 %v217, %v330
    %332 = vdwg.mxu0
    %vm333 = vcmp.gt.f32.partialorder %v286, 0.0
    %vm334 = vcmp.gt.f32.partialorder %v289, 0.0
    %vm335 = vcmp.gt.f32.partialorder %v292, 0.0
    %vm336 = vcmp.gt.f32.partialorder %v295, 0.0
    %vm337 = vcmp.gt.f32.partialorder %v298, 0.0
    %vm338 = vcmp.gt.f32.partialorder %v301, 0.0
    %vm339 = vcmp.gt.f32.partialorder %v304, 0.0
    %vm340 = vcmp.gt.f32.partialorder %v307, 0.0
    %vm341 = vcmp.gt.f32.partialorder %v310, 0.0
    %vm342 = vcmp.gt.f32.partialorder %v313, 0.0
    %vm343 = vcmp.gt.f32.partialorder %v316, 0.0
    %vm344 = vcmp.gt.f32.partialorder %v319, 0.0
    %vm345 = vcmp.gt.f32.partialorder %v322, 0.0
    %vm346 = vcmp.gt.f32.partialorder %v325, 0.0
    %vm347 = vcmp.gt.f32.partialorder %v328, 0.0
    %vm348 = vcmp.gt.f32.partialorder %v331, 0.0
    %v349 = vmul.f32 %v286, 0.01
    %v350 = vmul.f32 %v289, 0.01
    %v351 = vmul.f32 %v292, 0.01
    %v352 = vmul.f32 %v295, 0.01
    %v353 = vmul.f32 %v298, 0.01
    %v354 = vmul.f32 %v301, 0.01
    %v355 = vmul.f32 %v304, 0.01
    %v356 = vmul.f32 %v307, 0.01
    %v357 = vmul.f32 %v310, 0.01
    %v358 = vmul.f32 %v313, 0.01
    %v359 = vmul.f32 %v316, 0.01
    %v360 = vmul.f32 %v319, 0.01
    %v361 = vmul.f32 %v322, 0.01
    %v362 = vmul.f32 %v325, 0.01
    %v363 = vmul.f32 %v328, 0.01
    %v364 = vmul.f32 %v331, 0.01
    %v365 = vsel %vm333, %v286, %v349
    %v366 = vsel %vm334, %v289, %v350
    %v367 = vsel %vm335, %v292, %v351
    %v368 = vsel %vm336, %v295, %v352
    %v369 = vsel %vm337, %v298, %v353
    %v370 = vsel %vm338, %v301, %v354
    %v371 = vsel %vm339, %v304, %v355
    %v372 = vsel %vm340, %v307, %v356
    %v373 = vsel %vm341, %v310, %v357
    %v374 = vsel %vm342, %v313, %v358
    %v375 = vsel %vm343, %v316, %v359
    %v376 = vsel %vm344, %v319, %v360
    %v377 = vsel %vm345, %v322, %v361
    %v378 = vsel %vm346, %v325, %v362
    %v379 = vsel %vm347, %v328, %v363
    %v380 = vsel %vm348, %v331, %v364
    %v381 = vld [vmem:[%s5] sm:$0x3]
    %v382 = vld [vmem:[%s6] sm:$0x3]
    %384 = vset.pattern.permute.xlu0 0
    %385 = vperm.xlu0 %384, %v382
    %v386 = vpop.permute.xlu0 %385
    %v389 = vsel %vm219, %v381, 0
    %v392 = vsel %vm219, %v365, 0
    %v395 = vsel %vm219, %v366, 0
    %v398 = vsel %vm219, %v367, 0
    %v401 = vsel %vm219, %v368, 0
    %v404 = vsel %vm219, %v369, 0
    %v407 = vsel %vm219, %v370, 0
    %v410 = vsel %vm219, %v371, 0
    %v413 = vsel %vm219, %v372, 0
    %v416 = vsel %vm219, %v373, 0
    %v419 = vsel %vm219, %v374, 0
    %v422 = vsel %vm219, %v375, 0
    %v425 = vsel %vm219, %v376, 0
    %v428 = vsel %vm219, %v377, 0
    %v431 = vsel %vm219, %v378, 0
    %v434 = vsel %vm219, %v379, 0
    %v437 = vsel %vm219, %v380, 0
    %439 = vmatpush.xpose.msra.mxu0 %v437
    %440 = vmatpush.xpose.msra.mxu0 %v434
    %441 = vmatpush.xpose.msra.mxu0 %v431
    %442 = vmatpush.xpose.msra.mxu0 %v428
    %443 = vmatpush.xpose.msra.mxu0 %v425
    %444 = vmatpush.xpose.msra.mxu0 %v422
    %445 = vmatpush.xpose.msra.mxu0 %v419
    %446 = vmatpush.xpose.msra.mxu0 %v416
    %447 = vmatpush.xpose.msra.mxu0 %v413
    %448 = vmatpush.xpose.msra.mxu0 %v410
    %449 = vmatpush.xpose.msra.mxu0 %v407
    %450 = vmatpush.xpose.msra.mxu0 %v404
    %451 = vmatpush.xpose.msra.mxu0 %v401
    %452 = vmatpush.xpose.msra.mxu0 %v398
    %453 = vmatpush.xpose.msra.mxu0 %v395
    %454 = vmatpush.xpose.msra.mxu0 %v392
    %455 = vmatmul.f32.gmra.mxu0 %v389
    %v456 = vpop.f32.mrf.mxu0
    %v457 = vadd.f32 %v386, %v456
    %458 = vdwg.mxu0
    %v459 = vlaneseq
    %v460 = vshrl.u32 %v459, 7
    %vm461 = vcmp.eq.s32.totalorder %v460, 1
    %v462 = vmul.f32 %v457, 1.442695
    %v463 = vpow.pop %v462
    %v464 = vadd.f32 %v463, 1e-05
    %v465 = vsel %vm461, %v464, %v457
    %466 = vst [vmem:[#allocation2] sm:$0x3] %v465
    // Predicated region
    $region30: #{tpu_custom_call.1} parent=1 // pred_check
      _
    $region31: #{tpu_custom_call.1} parent=1 // pred_check_branch
      %468 = sbr.rel (0) target = $region33
    $region32: #{tpu_custom_call.1} parent=1 // pred_region
      %470 = vsyncadd [#allocation3], 0
      %s472 = sshll.u32 [#allocation2], 4
      %s473 = int_to_ptr.vmem [resolvable:$true] %s472
      %s474 = sshll.u32 %s7, 4
      %s475 = int_to_ptr.hbm [resolvable:$true] %s474
      %477 = dma.vmem_to_hbm [thread:$0]  %s473, 32, %s475, [#allocation3]
    $region33: #{tpu_custom_call.1} parent=1 // pred_fallthru
      _
    // Predicated region
    $region34: #{tpu_custom_call.1} parent=1 // pred_check
      _
    $region35: #{tpu_custom_call.1} parent=1 // pred_check_branch
      %479 = sbr.rel (0) target = $region37
    $region36: #{tpu_custom_call.1} parent=1 // pred_region
      %481 = dma.done [#allocation3], 32
    $region37: #{tpu_custom_call.1} parent=1 // pred_fallthru
      _
    %482 = vsyncpa [#allocation3], 1

</llo_original>
